<compile_context>
chip_gen: v7x
topology: tpu7x:2x2x1
jax: 0.10.0
libtpu: 0.0.40
codegen_flags: <defaults>
</compile_context>

<pallas_src>
import functools
import math

import jax
import jax.numpy as jnp
from jax.experimental import pallas as pl
from jax.experimental.pallas import tpu as pltpu


_FAST_PATH_ELEMS = 2048            # below this, plain XLA fusion wins
_CHUNK_ELEMS = 128 * 1024          # ~512 KiB of f32 per in-kernel temporary
_MAX_CHUNK_ROWS = 512              # 256-512 row sub-chunks keep temps bounded
_MAX_FOLD_W = 8192                 # cap on folded lane width
_MIN_STEP_BYTES = 2 * 1024 * 1024  # keep per-step DMA non-trivial when splitting


def mcrmse_ref(logits, targets):
    """Pure-JAX reference matching the PyTorch module."""
    mse = (logits.astype(jnp.float32) - targets.astype(jnp.float32)) ** 2
    return jnp.mean(jnp.sqrt(jnp.mean(mse, axis=0)))


def _round_up(x, m):
    return ((x + m - 1) // m) * m


def _round_down(x, m):
    return (x // m) * m


def _sublane_multiple(dtype):
    return {4: 8, 2: 16, 1: 32}.get(jnp.dtype(dtype).itemsize, 8)


def _vmem_capacity_bytes():
    # NOTE: assumed to be per-TensorCore; the 0.75x limit + hard caps below keep
    # us safe even if a whole-chip number is ever reported.
    try:
        info = pltpu.get_tpu_info()
        cap = getattr(info, "vmem_capacity_bytes", None)
        if cap:
            return int(cap)
    except Exception:
        pass
    return 64 * 1024 * 1024   # conservative: v7x per-TensorCore VMEM


def _choose_fold(n, d):
    """Fold factor k so k*d % 128 == 0, preferring k that divides n exactly."""
    k_min = 128 // math.gcd(d, 128)
    if k_min == 1:
        return 1
    m = 1
    while m * k_min * d <= _MAX_FOLD_W:
        k = m * k_min
        if n % k == 0:
            return k          # no slice copy, no ragged remainder
        m += 1
    if d >= 32:
        # No clean fold: full rows are still one contiguous DMA; accept lane
        # padding in VMEM rather than a full wrapper-side slice copy of inputs.
        return 1
    return k_min              # tiny d: folding essential; accept slice + tail


def _sse_partial_kernel(l_ref, t_ref, out_ref, *, n_rows, tile_rows,
                        chunk_rows, width, ragged):
    """One grid step: accumulate a lane-dense (8, width) partial sum of squared
    errors, streaming the (tile_rows, width) block in bounded sub-chunks so f32
    temporaries never scale with tile_rows."""
    i = pl.program_id(0)
    out_ref[...] = jnp.zeros_like(out_ref)
    n_chunks = tile_rows // chunk_rows
    align = chunk_rows & -chunk_rows          # largest power-of-two divisor

    def accumulate(masked):
        def body(c, carry):
            r0 = c * chunk_rows
            if not isinstance(r0, int):
                r0 = pl.multiple_of(r0, align)
            l = l_ref[pl.ds(r0, chunk_rows), :].astype(jnp.float32)
            t = t_ref[pl.ds(r0, chunk_rows), :].astype(jnp.float32)
            sq = (l - t) * (l - t)
            if masked:
                row = (i * tile_rows + r0
                       + jax.lax.broadcasted_iota(jnp.int32, (chunk_rows, 1), 0))
                sq = jnp.where(row < n_rows, sq, 0.0)
            # Defer the cross-sublane (XLU) 8->1 reduce to the wrapper: group
            # rows by vreg sublane and add vregs (pure VPU adds).
            out_ref[...] += jnp.sum(
                sq.reshape(chunk_rows // 8, 8, width), axis=0)
            return carry

        jax.lax.fori_loop(0, n_chunks, body, 0, unroll=n_chunks <= 4)

    if not ragged:
        accumulate(masked=False)
    else:
        last = pl.num_programs(0) - 1

        @pl.when(i != last)
        def _():
            accumulate(masked=False)     # interior tiles: no iota/compare/select

        @pl.when(i == last)
        def _():
            accumulate(masked=True)      # only the tail tile pays for masking


def mcrmse(logits, targets):
    """Pallas implementation of MCRMSE.forward. Returns a scalar (float32)."""
    assert logits.shape == targets.shape, "logits/targets must have same shape"
    n = logits.shape[0]
    d = 1
    for s in logits.shape[1:]:
        d *= s
    l2 = logits.reshape(n, d)
    t2 = targets.reshape(n, d)

    sub_mult = max(_sublane_multiple(l2.dtype), _sublane_multiple(t2.dtype))

    # Lane folding: (N, d) -> (N/k, k*d) with k*d % 128 == 0 where profitable.
    k = _choose_fold(n, d)
    n_main = (n // k) * k          # rows handled by the kernel
    n_f = n_main // k              # folded rows seen by the kernel
    w = k * d                      # folded (lane) width

    # Tiny problems: pallas_call setup cost dominates; let XLA fuse it.
    if n * d <= _FAST_PATH_ELEMS or n_f < sub_mult:
        return mcrmse_ref(l2, t2)

    if k == 1:
        l_fold, t_fold = l2, t2
    elif n_main == n:
        l_fold = l2.reshape(n_f, w)
        t_fold = t2.reshape(n_f, w)
    else:
        # Only taken for tiny d with awkward N, where per-row strided DMA would
        # be far worse than one extra (small) copy of the inputs.
        l_fold = l2[:n_main].reshape(n_f, w)
        t_fold = t2[:n_main].reshape(n_f, w)

    # --- VMEM budgets (generation-aware) -------------------------------------
    vmem_cap = _vmem_capacity_bytes()
    vmem_limit = max(32 * 1024 * 1024,
                     min(int(vmem_cap * 0.75), 100 * 1024 * 1024))
    input_cap = (80 * 1024 * 1024 if vmem_cap >= 96 * 1024 * 1024
                 else 40 * 1024 * 1024)
    input_budget = min(int(vmem_limit * 0.8), input_cap)

    w_pad = _round_up(w, 128)
    itemsize = max(jnp.dtype(l2.dtype).itemsize, jnp.dtype(t2.dtype).itemsize)
    bytes_per_row = w_pad * itemsize

    # Sub-chunk rows: bound the in-kernel f32 temporaries (~6 chunk-sized
    # arrays live at once) independently of the DMA tile size.
    chunk_rows = _round_down(max(_CHUNK_ELEMS // w_pad, sub_mult), sub_mult)
    chunk_rows = max(min(chunk_rows, _MAX_CHUNK_ROWS), sub_mult)
    chunk_rows = min(chunk_rows, _round_up(n_f, sub_mult))

    def fits(rows):
        return (4 * rows * bytes_per_row          # 2 inputs x 2 pipeline bufs
                + 6 * rows * w_pad * 4            # bounded f32 temporaries
                + 2 * 8 * w_pad * 4) <= input_budget

    while chunk_rows > sub_mult and not fits(chunk_rows):
        chunk_rows = max(_round_down(chunk_rows // 2, sub_mult), sub_mult)
    if not fits(chunk_rows):
        # TODO(synk): ultra-wide feature dims need a feature-axis grid dimension.
        return mcrmse_ref(l2, t2)

    temp_bytes = 6 * chunk_rows * w_pad * 4 + 2 * 8 * w_pad * 4
    tn = (input_budget - temp_bytes) // (4 * bytes_per_row)
    tn = max(_round_down(tn, chunk_rows), chunk_rows)
    tn = min(tn, _round_up(n_f, chunk_rows))

    steps = -(-n_f // tn)
    # v7x megacore: avoid a single-step grid when per-step DMA slabs can stay
    # reasonably large, so both TensorCores share the work.
    if steps == 1 and n_f > chunk_rows:
        for parts in (8, 4, 2):
            cand = _round_down(-(-n_f // parts), chunk_rows)
            if cand >= chunk_rows and 2 * cand * bytes_per_row >= _MIN_STEP_BYTES:
                tn = cand
                steps = -(-n_f // tn)
                break

    ragged = (n_f % tn) != 0

    kernel = functools.partial(
        _sse_partial_kernel, n_rows=n_f, tile_rows=tn,
        chunk_rows=chunk_rows, width=w, ragged=ragged)

    cost = pl.CostEstimate(
        flops=3 * n_f * w,
        transcendentals=0,
        bytes_accessed=2 * n_f * w * itemsize + steps * 8 * w * 4)

    parts_out = pl.pallas_call(
        kernel,
        out_shape=jax.ShapeDtypeStruct((steps, 8, w), jnp.float32),
        grid=(steps,),
        in_specs=[
            pl.BlockSpec((tn, w), lambda i: (i, 0)),
            pl.BlockSpec((tn, w), lambda i: (i, 0)),
        ],
        out_specs=pl.BlockSpec((None, 8, w), lambda i: (i, 0, 0)),
        compiler_params=pltpu.CompilerParams(
            dimension_semantics=("parallel",),
            vmem_limit_bytes=int(vmem_limit),
        ),
        cost_estimate=cost,
    )(l_fold, t_fold)

    # Tiny final reductions (steps x 8 sublanes x k fold) in the wrapper.
    sse_w = jnp.sum(parts_out, axis=(0, 1))        # (w,)
    col_sse = sse_w.reshape(k, d).sum(axis=0)      # (d,) per-column SSE

    if n_main < n:                                 # ragged remainder (< k rows)
        lt = l2[n_main:].astype(jnp.float32)
        tt = t2[n_main:].astype(jnp.float32)
        col_sse = col_sse + jnp.sum((lt - tt) ** 2, axis=0)

    col_rmse = jnp.sqrt(col_sse / jnp.float32(n))  # mean over batch, then sqrt
    return jnp.mean(col_rmse)                      # mean over columns


if __name__ == "__main__":
    key = jax.random.PRNGKey(0)

    test_cases = [
        ((8, 32), jnp.float32),      # tiny -> fast path (plain XLA)
        ((1030, 6), jnp.float32),    # tiny d -> fold k=64 + ragged wrapper tail
        ((512, 32), jnp.float32),    # d=32 -> k=4 fold, divides evenly
        ((264, 160), jnp.bfloat16),  # d=160 -> k=4 fold, masked tail tile
        ((2048, 128), jnp.float32),  # lane-dense, multi-chunk inner loop
    ]

    for shape, dt in test_cases:
        key, k1, k2 = jax.random.split(key, 3)
        logits = jax.random.normal(k1, shape, dtype=jnp.float32).astype(dt)
        targets = jax.random.normal(k2, shape, dtype=jnp.float32).astype(dt)

        loss = mcrmse(logits, targets)
        jax.block_until_ready(loss)

        ref = mcrmse_ref(logits, targets)
        assert jnp.allclose(loss, ref, rtol=1e-4, atol=1e-5), (shape, dt, loss, ref)

    print("KERNEL_OK")
</pallas_src>

<mosaic_0001>
module attributes {stable_mosaic.version = 11 : i64} {
  func.func @_sse_partial_kernel(%arg0: i32, %arg1: memref<16x384xf32, #tpu.memory_space<vmem>>, %arg2: memref<16x384xf32, #tpu.memory_space<vmem>>, %arg3: memref<1x8x384xf32, #tpu.memory_space<vmem>>) attributes {dimension_semantics = [#tpu.dimension_semantics<parallel>], iteration_bounds = array<i64: 1>, scalar_prefetch = 0 : i64, scratch_operands = 0 : i64, tpu.core_type = #tpu.core_type<tc>, window_params = [{transform_indices = @transform_0, window_bounds = array<i64: 16, 384>}, {transform_indices = @transform_1, window_bounds = array<i64: 16, 384>}, {transform_indices = @transform_2, window_bounds = array<i64: 1, 8, 384>}]} {
    %cst = arith.constant 0.000000e+00 : f32
    %0 = vector.broadcast %cst : f32 to vector<8x384xf32>
    %c0 = arith.constant 0 : index
    %c0_0 = arith.constant 0 : index
    %c0_1 = arith.constant 0 : index
    %1 = vector.load %arg3[%c0, %c0_0, %c0_1] : memref<1x8x384xf32, #tpu.memory_space<vmem>>, vector<1x8x384xf32>
    %2 = vector.shape_cast %1 : vector<1x8x384xf32> to vector<8x384xf32>
    %3 = vector.shape_cast %0 : vector<8x384xf32> to vector<1x8x384xf32>
    tpu.vector_store %arg3[%c0, %c0_0, %c0_1], %3 {strides = array<i32>} : memref<1x8x384xf32, #tpu.memory_space<vmem>>, vector<1x8x384xf32>,
    %c0_i32 = arith.constant 0 : i32
    %c16_i32 = arith.constant 16 : i32
    %4 = arith.muli %c0_i32, %c16_i32 : i32
    %5 = tpu.assume_multiple %4, 16 : i32
    %6 = arith.index_cast %5 : i32 to index
    %c0_2 = arith.constant 0 : index
    %7 = vector.load %arg1[%6, %c0_2] : memref<16x384xf32, #tpu.memory_space<vmem>>, vector<16x384xf32>
    %8 = arith.index_cast %5 : i32 to index
    %c0_3 = arith.constant 0 : index
    %9 = vector.load %arg2[%8, %c0_3] : memref<16x384xf32, #tpu.memory_space<vmem>>, vector<16x384xf32>
    %10 = arith.subf %7, %9 : vector<16x384xf32>
    %11 = arith.subf %7, %9 : vector<16x384xf32>
    %12 = arith.mulf %10, %11 : vector<16x384xf32>
    %c0_4 = arith.constant 0 : index
    %c0_5 = arith.constant 0 : index
    %c0_6 = arith.constant 0 : index
    %13 = vector.load %arg3[%c0_4, %c0_5, %c0_6] : memref<1x8x384xf32, #tpu.memory_space<vmem>>, vector<1x8x384xf32>
    %14 = vector.shape_cast %13 : vector<1x8x384xf32> to vector<8x384xf32>
    %15 = vector.shape_cast %12 : vector<16x384xf32> to vector<2x8x384xf32>
    %cst_7 = arith.constant dense<0.000000e+00> : vector<8x384xf32>
    %16 = vector.multi_reduction <add>, %15, %cst_7 [0] : vector<2x8x384xf32> to vector<8x384xf32>
    %17 = arith.addf %14, %16 : vector<8x384xf32>
    %c0_8 = arith.constant 0 : index
    %c0_9 = arith.constant 0 : index
    %c0_10 = arith.constant 0 : index
    %18 = vector.load %arg3[%c0_8, %c0_9, %c0_10] : memref<1x8x384xf32, #tpu.memory_space<vmem>>, vector<1x8x384xf32>
    %19 = vector.shape_cast %18 : vector<1x8x384xf32> to vector<8x384xf32>
    %20 = vector.shape_cast %17 : vector<8x384xf32> to vector<1x8x384xf32>
    tpu.vector_store %arg3[%c0_8, %c0_9, %c0_10], %20 {strides = array<i32>} : memref<1x8x384xf32, #tpu.memory_space<vmem>>, vector<1x8x384xf32>,
    %c1_i32 = arith.constant 1 : i32
    return
  }
  func.func @transform_0(%arg0: i32) -> (i32, i32) {
    %c0_i32 = arith.constant 0 : i32
    %c0_i32_0 = arith.constant 0 : i32
    return %arg0, %c0_i32 : i32, i32
  }
  func.func @transform_1(%arg0: i32) -> (i32, i32) {
    %c0_i32 = arith.constant 0 : i32
    %c0_i32_0 = arith.constant 0 : i32
    return %arg0, %c0_i32 : i32, i32
  }
  func.func @transform_2(%arg0: i32) -> (i32, i32, i32) {
    %c0_i32 = arith.constant 0 : i32
    %c0_i32_0 = arith.constant 0 : i32
    %c0_i32_1 = arith.constant 0 : i32
    return %arg0, %c0_i32, %c0_i32_0 : i32, i32, i32
  }
}

</mosaic_0001>

<llo_original>
// kernel: tpu_custom_call.1
$region0: #{tpu_custom_call.1}
  #allocation0 [shape = 'u32[]', space=smem, size = 0x4, offset = 0x4, fixed_abs, tag = 'smem constant byte address 0x4 - core index']
  #allocation1 [shape = 'u32[144,128]{1,0:T(1,128)}', space=vmem, size = 0x12000, scoped, tag = 'internal scratch']
  %s0 = inlined_call_operand.hbm [shape: f32[16,384], index: 0, kind: input, shape index: {}]
  %s1 = inlined_call_operand.hbm [shape: f32[16,384], index: 1, kind: input, shape index: {}]
  %s2 = inlined_call_operand.hbm [shape: f32[1,8,384], index: 2, kind: output, shape index: {}]
  %s3 = sld [smem:[#allocation0]]
  $region26: #{tpu_custom_call.1} parent=0
    _
  %s5 = ssub.s32 1, %s3
  %s6 = scalar_select 0, %s5, %s3
  $region1: #{tpu_custom_call.1} parent=0
    #allocation2 [shape = 'u8[24576]{0}', space=vmem, size = 0x6000, scoped, tag = 'input window, operand 0, single buffered']
    #allocation3 [shape = 's32[1]{0}', space=sflag, size = 0x4, scoped, tag = 'scoped memory for tpu_custom_call.1']
    #allocation4 [shape = 's32[1]{0}', space=sflag, size = 0x4, scoped, tag = 'scoped memory for tpu_custom_call.1']
    #allocation5 [shape = 'u8[24576]{0}', space=vmem, size = 0x6000, scoped, tag = 'input window, operand 1, single buffered']
    #allocation6 [shape = 's32[1]{0}', space=sflag, size = 0x4, scoped, tag = 'scoped memory for tpu_custom_call.1']
    #allocation7 [shape = 'u8[12288]{0}', space=vmem, size = 0x3000, scoped, tag = 'output window, operand 0, single buffered']
    %7 = vsyncpa [#allocation3], 0
    %8 = vsyncpa [#allocation6], 0
    %9 = vsyncpa [#allocation4], 0
    // Predicated region
    $region2: #{tpu_custom_call.1} parent=1 // pred_check
      _
    $region3: #{tpu_custom_call.1} parent=1 // pred_check_branch
      %11 = sbr.rel (0) target = $region5
    $region4: #{tpu_custom_call.1} parent=1 // pred_region
      %s13 = ssub.s32 768, 768
      %14 = vsyncadd [#allocation3], %s13
      %s15 = sshll.u32 [#allocation2], 4
      %s16 = int_to_ptr.vmem [resolvable:$true] %s15
      %21 = dma.hbm_to_vmem [thread:$0]  %s0, 768, %s16, [#allocation3], 384, 384, 24
    $region5: #{tpu_custom_call.1} parent=1 // pred_fallthru
      _
    // Predicated region
    $region6: #{tpu_custom_call.1} parent=1 // pred_check
      _
    $region7: #{tpu_custom_call.1} parent=1 // pred_check_branch
      %23 = sbr.rel (0) target = $region9
    $region8: #{tpu_custom_call.1} parent=1 // pred_region
      %s25 = ssub.s32 768, 768
      %26 = vsyncadd [#allocation6], %s25
      %s27 = sshll.u32 [#allocation5], 4
      %s28 = int_to_ptr.vmem [resolvable:$true] %s27
      %33 = dma.hbm_to_vmem [thread:$0]  %s1, 768, %s28, [#allocation6], 384, 384, 24
    $region9: #{tpu_custom_call.1} parent=1 // pred_fallthru
      _
    // Predicated region
    $region10: #{tpu_custom_call.1} parent=1 // pred_check
      _
    $region11: #{tpu_custom_call.1} parent=1 // pred_check_branch
      %35 = sbr.rel (0) target = $region13
    $region12: #{tpu_custom_call.1} parent=1 // pred_region
      %36 = dma.done [#allocation3], 768
    $region13: #{tpu_custom_call.1} parent=1 // pred_fallthru
      _
    // Predicated region
    $region14: #{tpu_custom_call.1} parent=1 // pred_check
      _
    $region15: #{tpu_custom_call.1} parent=1 // pred_check_branch
      %38 = sbr.rel (0) target = $region17
    $region16: #{tpu_custom_call.1} parent=1 // pred_region
      %39 = dma.done [#allocation6], 768
    $region17: #{tpu_custom_call.1} parent=1 // pred_fallthru
      _
    %40 = vst [vmem:[#allocation7] sm:$0xff] 0.0
    %41 = vst [vmem:[#allocation7 + $0x8] sm:$0xff] 0.0
    %42 = vst [vmem:[#allocation7 + $0x10] sm:$0xff] 0.0
    %s43 = smul.u32 0, 3
    %s44 = smul.addr %s43, 8
    %s45 = scalar_lea.vmem [#allocation2], %s44
    %v46 = vld [vmem:[%s45] sm:$0xff]
    %v47 = vld [vmem:[%s45 + $0x8] sm:$0xff]
    %v48 = vld [vmem:[%s45 + $0x10] sm:$0xff]
    %v49 = vld [vmem:[%s45 + $0x18] sm:$0xff]
    %v50 = vld [vmem:[%s45 + $0x20] sm:$0xff]
    %v51 = vld [vmem:[%s45 + $0x28] sm:$0xff]
    %s52 = smul.addr %s43, 8
    %s53 = scalar_lea.vmem [#allocation5], %s52
    %v54 = vld [vmem:[%s53] sm:$0xff]
    %v55 = vld [vmem:[%s53 + $0x8] sm:$0xff]
    %v56 = vld [vmem:[%s53 + $0x10] sm:$0xff]
    %v57 = vld [vmem:[%s53 + $0x18] sm:$0xff]
    %v58 = vld [vmem:[%s53 + $0x20] sm:$0xff]
    %v59 = vld [vmem:[%s53 + $0x28] sm:$0xff]
    %v60 = vsub.f32 %v46, %v54
    %v61 = vsub.f32 %v47, %v55
    %v62 = vsub.f32 %v48, %v56
    %v63 = vsub.f32 %v49, %v57
    %v64 = vsub.f32 %v50, %v58
    %v65 = vsub.f32 %v51, %v59
    %v66 = vmul.f32 %v60, %v60
    %v67 = vmul.f32 %v61, %v61
    %v68 = vmul.f32 %v62, %v62
    %v69 = vmul.f32 %v63, %v63
    %v70 = vmul.f32 %v64, %v64
    %v71 = vmul.f32 %v65, %v65
    %v72 = vld [vmem:[#allocation7] sm:$0xff]
    %v73 = vld [vmem:[#allocation7 + $0x8] sm:$0xff]
    %v74 = vld [vmem:[#allocation7 + $0x10] sm:$0xff]
    %v75 = vadd.f32 %v66, %v69
    %v76 = vadd.f32 %v67, %v70
    %v77 = vadd.f32 %v68, %v71
    %v78 = vadd.f32 %v72, %v75
    %v79 = vadd.f32 %v73, %v76
    %v80 = vadd.f32 %v74, %v77
    %81 = vst [vmem:[#allocation7] sm:$0xff] %v78
    %82 = vst [vmem:[#allocation7 + $0x8] sm:$0xff] %v79
    %83 = vst [vmem:[#allocation7 + $0x10] sm:$0xff] %v80
    // Predicated region
    $region18: #{tpu_custom_call.1} parent=1 // pred_check
      _
    $region19: #{tpu_custom_call.1} parent=1 // pred_check_branch
      %85 = sbr.rel (0) target = $region21
    $region20: #{tpu_custom_call.1} parent=1 // pred_region
      %s87 = ssub.s32 384, 384
      %88 = vsyncadd [#allocation4], %s87
      %s90 = sshll.u32 [#allocation7], 4
      %s91 = int_to_ptr.vmem [resolvable:$true] %s90
      %93 = dma.vmem_to_hbm [thread:$0]  %s91, 384, %s2, [#allocation4]
    $region21: #{tpu_custom_call.1} parent=1 // pred_fallthru
      _
    // Predicated region
    $region22: #{tpu_custom_call.1} parent=1 // pred_check
      _
    $region23: #{tpu_custom_call.1} parent=1 // pred_check_branch
      %95 = sbr.rel (0) target = $region25
    $region24: #{tpu_custom_call.1} parent=1 // pred_region
      %96 = dma.done [#allocation4], 384
    $region25: #{tpu_custom_call.1} parent=1 // pred_fallthru
      _
    %97 = vsyncpa [#allocation3], 1
    %98 = vsyncpa [#allocation6], 1
    %99 = vsyncpa [#allocation4], 1

</llo_original>
